<compile_context>
chip_gen: v7x
topology: tpu7x:2x2x1
jax: 0.10.0
libtpu: 0.0.40
codegen_flags: <defaults>
</compile_context>

<pallas_src>
import jax
import jax.numpy as jnp
from jax.experimental import pallas as pl
from jax.experimental.pallas import tpu as pltpu

_VMEM_LIMIT = 32 * 1024 * 1024   # scoped-VMEM budget valid on v5e / v6e / v7x
_TARGET_ROWS = 512               # 512 x 128 = 65536 elements per grid step
_LANE = 128


def _round_up(v, m):
    return ((v + m - 1) // m) * m


# ---------------------------------------------------------------------------
# Kernel bodies
# ---------------------------------------------------------------------------
def _outconv_kernel_4d(x_ref, w_ref, b_ref, o_ref):
    """Sublane/lane-dense body.

    x_ref: (Nb, Cin, Rt, 128) VMEM    w_ref: (Cout, Cin) SMEM
    b_ref: (Cout,) SMEM               o_ref: (Nb, Cout, Rt, 128) VMEM
    """
    cout, cin = w_ref.shape
    x = x_ref[...].astype(jnp.float32)           # fully (8,128)-dense slabs
    # TODO(synk): on v6e/v7x with bf16 activations the f32 upcast could be
    # skipped (bf16-native VALU); kept for accuracy + v5e compatibility.
    for co in range(cout):                       # tiny Cout*Cin, fully unrolled
        acc = x[:, 0:1] * w_ref[co, 0]
        for ci in range(1, cin):
            acc = acc + x[:, ci:ci + 1] * w_ref[co, ci]
        # Direct slab store per output channel — no concatenate / packing.
        o_ref[:, co:co + 1, :, :] = (acc + b_ref[co]).astype(o_ref.dtype)


def _outconv_kernel_2d(x_ref, w_ref, b_ref, o_ref):
    """Fallback (lane-dense only) body when H*W is not a multiple of 128.

    x_ref: (Cin, T) VMEM   o_ref: (Cout, T) VMEM
    """
    cout, cin = w_ref.shape
    x = x_ref[...].astype(jnp.float32)
    for co in range(cout):
        acc = x[0:1, :] * w_ref[co, 0]
        for ci in range(1, cin):
            acc = acc + x[ci:ci + 1, :] * w_ref[co, ci]
        o_ref[co:co + 1, :] = (acc + b_ref[co]).astype(o_ref.dtype)


# ---------------------------------------------------------------------------
# Tiling helpers
# ---------------------------------------------------------------------------
def _choose_tiles_4d(n, r, cin, cout, dtype_bytes, vmem_limit):
    """Pick (n_tile, r_tile) for the (N, Cin, R, 128) layout."""
    # Input + output block bytes per 128-lane row, double-buffered (x2 once).
    bytes_per_row = 2 * (cin + cout) * _LANE * dtype_bytes
    cap_rows = max(8, int(vmem_limit * 0.8) // bytes_per_row)
    rows = min(_TARGET_ROWS, cap_rows)

    if r <= rows:
        r_tile = r                                   # whole image per step
        n_tile = max(1, min(n, rows // max(r, 1)))   # fold batch into block
    else:
        r_tile = max(8, (rows // 8) * 8)             # sublane multiple of 8
        n_tile = 1

    # Keep >= 2 grid steps so both v7x TensorCores get work (harmless on
    # single-TC v5e/v6e since each step is still large).
    steps = pl.cdiv(n, n_tile) * pl.cdiv(r, r_tile)
    if steps < 2:
        if n >= 2:
            n_tile = (n + 1) // 2
        elif r >= 16:
            r_tile = _round_up((r + 1) // 2, 8)
    return n_tile, r_tile


def _choose_tile_hw(hw, cin, cout, dtype_bytes, vmem_limit, n):
    """Lane-aligned spatial tile for the 2D fallback path."""
    per_elem = 2 * (cin + cout) * dtype_bytes        # double-buffered in + out
    cap = max(_LANE, int(vmem_limit * 0.8) // per_elem)
    target = _TARGET_ROWS * _LANE                    # ~64K elements / step
    tile = max(_LANE, (min(target, cap) // _LANE) * _LANE)
    hw_pad = _round_up(hw, _LANE)
    tile = min(tile, hw_pad)
    if n == 1 and tile >= hw_pad and hw >= 2 * _LANE:
        tile = _round_up(pl.cdiv(hw, 2), _LANE)      # >= 2 steps for v7x
    return tile


def _cost(n, hw, cin, cout, act_bytes, w_bytes):
    return pl.CostEstimate(
        flops=2 * n * hw * cin * cout,
        transcendentals=0,
        bytes_accessed=n * hw * (cin + cout) * act_bytes
        + (cin * cout + cout) * w_bytes,
    )


# ---------------------------------------------------------------------------
# pallas_call builders
# ---------------------------------------------------------------------------
def _outconv_4d(x_nchw, w_mat, b_vec):
    N, Cin, H, W = x_nchw.shape
    Cout = w_mat.shape[0]
    HW = H * W
    R = HW // _LANE
    act_bytes = jnp.dtype(x_nchw.dtype).itemsize
    w_bytes = jnp.dtype(w_mat.dtype).itemsize

    n_tile, r_tile = _choose_tiles_4d(N, R, Cin, Cout, act_bytes, _VMEM_LIMIT)
    grid = (pl.cdiv(N, n_tile), pl.cdiv(R, r_tile))

    x4d = x_nchw.reshape(N, Cin, R, _LANE)           # free reshape (NCHW kept)

    out4d = pl.pallas_call(
        _outconv_kernel_4d,
        out_shape=jax.ShapeDtypeStruct((N, Cout, R, _LANE), x_nchw.dtype),
        grid_spec=pltpu.PrefetchScalarGridSpec(
            num_scalar_prefetch=0,
            grid=grid,
            in_specs=[
                pl.BlockSpec((n_tile, Cin, r_tile, _LANE),
                             lambda nb, rb: (nb, 0, rb, 0)),
                pl.BlockSpec(memory_space=pltpu.MemorySpace.SMEM),
                pl.BlockSpec(memory_space=pltpu.MemorySpace.SMEM),
            ],
            out_specs=pl.BlockSpec((n_tile, Cout, r_tile, _LANE),
                                   lambda nb, rb: (nb, 0, rb, 0)),
        ),
        compiler_params=pltpu.CompilerParams(
            dimension_semantics=("parallel", "parallel"),
            vmem_limit_bytes=_VMEM_LIMIT,
        ),
        cost_estimate=_cost(N, HW, Cin, Cout, act_bytes, w_bytes),
    )(x4d, w_mat, b_vec)

    return out4d.reshape(N, Cout, H, W)              # free reshape back


def _outconv_2d(x_nchw, w_mat, b_vec):
    N, Cin, H, W = x_nchw.shape
    Cout = w_mat.shape[0]
    HW = H * W
    act_bytes = jnp.dtype(x_nchw.dtype).itemsize
    w_bytes = jnp.dtype(w_mat.dtype).itemsize

    tile_hw = _choose_tile_hw(HW, Cin, Cout, act_bytes, _VMEM_LIMIT, N)
    grid = (N, pl.cdiv(HW, tile_hw))

    x3d = x_nchw.reshape(N, Cin, HW)                 # free reshape

    out3d = pl.pallas_call(
        _outconv_kernel_2d,
        out_shape=jax.ShapeDtypeStruct((N, Cout, HW), x_nchw.dtype),
        grid_spec=pltpu.PrefetchScalarGridSpec(
            num_scalar_prefetch=0,
            grid=grid,
            in_specs=[
                pl.BlockSpec((None, Cin, tile_hw), lambda n, t: (n, 0, t)),
                pl.BlockSpec(memory_space=pltpu.MemorySpace.SMEM),
                pl.BlockSpec(memory_space=pltpu.MemorySpace.SMEM),
            ],
            out_specs=pl.BlockSpec((None, Cout, tile_hw), lambda n, t: (n, 0, t)),
        ),
        compiler_params=pltpu.CompilerParams(
            dimension_semantics=("parallel", "parallel"),
            vmem_limit_bytes=_VMEM_LIMIT,
        ),
        cost_estimate=_cost(N, HW, Cin, Cout, act_bytes, w_bytes),
    )(x3d, w_mat, b_vec)

    return out3d.reshape(N, Cout, H, W)


@jax.jit
def outconv_forward(x_nchw, weight, bias):
    """1x1 conv forward, matching nn.Conv2d(in_channels, out_channels, 1).

    Args:
      x_nchw: (N, Cin, H, W) input (PyTorch NCHW convention).
      weight: (Cout, Cin, 1, 1) conv weight (PyTorch layout).
      bias:   (Cout,) conv bias.
    Returns:
      (N, Cout, H, W) output, same dtype as x.
    """
    N, Cin, H, W = x_nchw.shape
    Cout = weight.shape[0]
    w_mat = weight.reshape(Cout, Cin)                # (Cout, Cin) -> SMEM
    b_vec = bias.reshape(Cout)                       # (Cout,)     -> SMEM
    if (H * W) % _LANE == 0:
        return _outconv_4d(x_nchw, w_mat, b_vec)     # sublane+lane dense path
    return _outconv_2d(x_nchw, w_mat, b_vec)         # lane-dense fallback


# ---------------------------------------------------------------------------
# Self-test
# ---------------------------------------------------------------------------
if __name__ == "__main__":
    N, Cin, Cout, H, W = 2, 4, 3, 16, 16

    key = jax.random.PRNGKey(0)
    kx, kw, kb = jax.random.split(key, 3)

    x = jax.random.normal(kx, (N, Cin, H, W), dtype=jnp.float32)
    bound = 1.0 / (Cin ** 0.5)
    weight = jax.random.uniform(kw, (Cout, Cin, 1, 1), jnp.float32, -bound, bound)
    bias = jax.random.uniform(kb, (Cout,), jnp.float32, -bound, bound)

    def ref_fn(xx):
        return (jnp.einsum("nchw,oc->nohw", xx, weight.reshape(Cout, Cin))
                + bias[None, :, None, None])

    # Main (sublane-dense) path: H*W = 256 is a multiple of 128.
    out = jax.block_until_ready(outconv_forward(x, weight, bias))
    assert out.shape == (N, Cout, H, W)
    assert jnp.allclose(out, ref_fn(x), atol=1e-5, rtol=1e-5)

    # Fallback path: H*W = 100 is NOT a multiple of 128.
    x_small = jax.random.normal(kx, (N, Cin, 10, 10), dtype=jnp.float32)
    out_small = jax.block_until_ready(outconv_forward(x_small, weight, bias))
    assert out_small.shape == (N, Cout, 10, 10)
    assert jnp.allclose(out_small, ref_fn(x_small), atol=1e-5, rtol=1e-5)

    print("KERNEL_OK")
</pallas_src>

<mosaic_0001>
module attributes {stable_mosaic.version = 11 : i64} {
  func.func @_outconv_kernel_4d(%arg0: i32, %arg1: i32, %arg2: memref<1x4x2x128xf32, #tpu.memory_space<vmem>>, %arg3: memref<3x4xf32, #tpu.memory_space<smem>>, %arg4: memref<3xf32, #tpu.memory_space<smem>>, %arg5: memref<1x3x2x128xf32, #tpu.memory_space<vmem>>) attributes {dimension_semantics = [#tpu.dimension_semantics<parallel>, #tpu.dimension_semantics<parallel>], iteration_bounds = array<i64: 2, 1>, scalar_prefetch = 0 : i64, scratch_operands = 0 : i64, tpu.core_type = #tpu.core_type<tc>, window_params = [{transform_indices = @transform_0, window_bounds = array<i64: 1, 4, 2, 128>}, {transform_indices = @transform_1, window_bounds = array<i64: 3, 4>}, {transform_indices = @transform_2, window_bounds = array<i64: 3>}, {transform_indices = @transform_3, window_bounds = array<i64: 1, 3, 2, 128>}]} {
    %c0 = arith.constant 0 : index
    %c0_0 = arith.constant 0 : index
    %c0_1 = arith.constant 0 : index
    %c0_2 = arith.constant 0 : index
    %0 = vector.load %arg2[%c0, %c0_0, %c0_1, %c0_2] : memref<1x4x2x128xf32, #tpu.memory_space<vmem>>, vector<1x4x2x128xf32>
    %1 = vector.extract_strided_slice %0 {offsets = [0, 0, 0, 0], sizes = [1, 1, 2, 128], strides = [1, 1, 1, 1]} : vector<1x4x2x128xf32> to vector<1x1x2x128xf32>
    %c0_3 = arith.constant 0 : index
    %c0_4 = arith.constant 0 : index
    %2 = memref.load %arg3[%c0_3, %c0_4] : memref<3x4xf32, #tpu.memory_space<smem>>
    %3 = vector.broadcast %2 : f32 to vector<1x1x2x128xf32>
    %4 = arith.mulf %1, %3 : vector<1x1x2x128xf32>
    %5 = vector.extract_strided_slice %0 {offsets = [0, 1, 0, 0], sizes = [1, 1, 2, 128], strides = [1, 1, 1, 1]} : vector<1x4x2x128xf32> to vector<1x1x2x128xf32>
    %c0_5 = arith.constant 0 : index
    %c1 = arith.constant 1 : index
    %6 = memref.load %arg3[%c0_5, %c1] : memref<3x4xf32, #tpu.memory_space<smem>>
    %7 = vector.broadcast %6 : f32 to vector<1x1x2x128xf32>
    %8 = arith.mulf %5, %7 : vector<1x1x2x128xf32>
    %9 = arith.addf %4, %8 : vector<1x1x2x128xf32>
    %10 = vector.extract_strided_slice %0 {offsets = [0, 2, 0, 0], sizes = [1, 1, 2, 128], strides = [1, 1, 1, 1]} : vector<1x4x2x128xf32> to vector<1x1x2x128xf32>
    %c0_6 = arith.constant 0 : index
    %c2 = arith.constant 2 : index
    %11 = memref.load %arg3[%c0_6, %c2] : memref<3x4xf32, #tpu.memory_space<smem>>
    %12 = vector.broadcast %11 : f32 to vector<1x1x2x128xf32>
    %13 = arith.mulf %10, %12 : vector<1x1x2x128xf32>
    %14 = arith.addf %9, %13 : vector<1x1x2x128xf32>
    %15 = vector.extract_strided_slice %0 {offsets = [0, 3, 0, 0], sizes = [1, 1, 2, 128], strides = [1, 1, 1, 1]} : vector<1x4x2x128xf32> to vector<1x1x2x128xf32>
    %c0_7 = arith.constant 0 : index
    %c3 = arith.constant 3 : index
    %16 = memref.load %arg3[%c0_7, %c3] : memref<3x4xf32, #tpu.memory_space<smem>>
    %17 = vector.broadcast %16 : f32 to vector<1x1x2x128xf32>
    %18 = arith.mulf %15, %17 : vector<1x1x2x128xf32>
    %19 = arith.addf %14, %18 : vector<1x1x2x128xf32>
    %c0_8 = arith.constant 0 : index
    %20 = memref.load %arg4[%c0_8] : memref<3xf32, #tpu.memory_space<smem>>
    %21 = vector.broadcast %20 : f32 to vector<1x1x2x128xf32>
    %22 = arith.addf %19, %21 : vector<1x1x2x128xf32>
    %c0_9 = arith.constant 0 : index
    %c0_10 = arith.constant 0 : index
    %c0_11 = arith.constant 0 : index
    %c0_12 = arith.constant 0 : index
    %23 = vector.load %arg5[%c0_9, %c0_10, %c0_11, %c0_12] : memref<1x3x2x128xf32, #tpu.memory_space<vmem>>, vector<1x1x2x128xf32>
    tpu.vector_store %arg5[%c0_9, %c0_10, %c0_11, %c0_12], %22 {strides = array<i32>} : memref<1x3x2x128xf32, #tpu.memory_space<vmem>>, vector<1x1x2x128xf32>,
    %24 = vector.extract_strided_slice %0 {offsets = [0, 0, 0, 0], sizes = [1, 1, 2, 128], strides = [1, 1, 1, 1]} : vector<1x4x2x128xf32> to vector<1x1x2x128xf32>
    %c1_13 = arith.constant 1 : index
    %c0_14 = arith.constant 0 : index
    %25 = memref.load %arg3[%c1_13, %c0_14] : memref<3x4xf32, #tpu.memory_space<smem>>
    %26 = vector.broadcast %25 : f32 to vector<1x1x2x128xf32>
    %27 = arith.mulf %24, %26 : vector<1x1x2x128xf32>
    %28 = vector.extract_strided_slice %0 {offsets = [0, 1, 0, 0], sizes = [1, 1, 2, 128], strides = [1, 1, 1, 1]} : vector<1x4x2x128xf32> to vector<1x1x2x128xf32>
    %c1_15 = arith.constant 1 : index
    %c1_16 = arith.constant 1 : index
    %29 = memref.load %arg3[%c1_15, %c1_16] : memref<3x4xf32, #tpu.memory_space<smem>>
    %30 = vector.broadcast %29 : f32 to vector<1x1x2x128xf32>
    %31 = arith.mulf %28, %30 : vector<1x1x2x128xf32>
    %32 = arith.addf %27, %31 : vector<1x1x2x128xf32>
    %33 = vector.extract_strided_slice %0 {offsets = [0, 2, 0, 0], sizes = [1, 1, 2, 128], strides = [1, 1, 1, 1]} : vector<1x4x2x128xf32> to vector<1x1x2x128xf32>
    %c1_17 = arith.constant 1 : index
    %c2_18 = arith.constant 2 : index
    %34 = memref.load %arg3[%c1_17, %c2_18] : memref<3x4xf32, #tpu.memory_space<smem>>
    %35 = vector.broadcast %34 : f32 to vector<1x1x2x128xf32>
    %36 = arith.mulf %33, %35 : vector<1x1x2x128xf32>
    %37 = arith.addf %32, %36 : vector<1x1x2x128xf32>
    %38 = vector.extract_strided_slice %0 {offsets = [0, 3, 0, 0], sizes = [1, 1, 2, 128], strides = [1, 1, 1, 1]} : vector<1x4x2x128xf32> to vector<1x1x2x128xf32>
    %c1_19 = arith.constant 1 : index
    %c3_20 = arith.constant 3 : index
    %39 = memref.load %arg3[%c1_19, %c3_20] : memref<3x4xf32, #tpu.memory_space<smem>>
    %40 = vector.broadcast %39 : f32 to vector<1x1x2x128xf32>
    %41 = arith.mulf %38, %40 : vector<1x1x2x128xf32>
    %42 = arith.addf %37, %41 : vector<1x1x2x128xf32>
    %c1_21 = arith.constant 1 : index
    %43 = memref.load %arg4[%c1_21] : memref<3xf32, #tpu.memory_space<smem>>
    %44 = vector.broadcast %43 : f32 to vector<1x1x2x128xf32>
    %45 = arith.addf %42, %44 : vector<1x1x2x128xf32>
    %c0_22 = arith.constant 0 : index
    %c1_23 = arith.constant 1 : index
    %c0_24 = arith.constant 0 : index
    %c0_25 = arith.constant 0 : index
    %46 = vector.load %arg5[%c0_22, %c1_23, %c0_24, %c0_25] : memref<1x3x2x128xf32, #tpu.memory_space<vmem>>, vector<1x1x2x128xf32>
    tpu.vector_store %arg5[%c0_22, %c1_23, %c0_24, %c0_25], %45 {strides = array<i32>} : memref<1x3x2x128xf32, #tpu.memory_space<vmem>>, vector<1x1x2x128xf32>,
    %47 = vector.extract_strided_slice %0 {offsets = [0, 0, 0, 0], sizes = [1, 1, 2, 128], strides = [1, 1, 1, 1]} : vector<1x4x2x128xf32> to vector<1x1x2x128xf32>
    %c2_26 = arith.constant 2 : index
    %c0_27 = arith.constant 0 : index
    %48 = memref.load %arg3[%c2_26, %c0_27] : memref<3x4xf32, #tpu.memory_space<smem>>
    %49 = vector.broadcast %48 : f32 to vector<1x1x2x128xf32>
    %50 = arith.mulf %47, %49 : vector<1x1x2x128xf32>
    %51 = vector.extract_strided_slice %0 {offsets = [0, 1, 0, 0], sizes = [1, 1, 2, 128], strides = [1, 1, 1, 1]} : vector<1x4x2x128xf32> to vector<1x1x2x128xf32>
    %c2_28 = arith.constant 2 : index
    %c1_29 = arith.constant 1 : index
    %52 = memref.load %arg3[%c2_28, %c1_29] : memref<3x4xf32, #tpu.memory_space<smem>>
    %53 = vector.broadcast %52 : f32 to vector<1x1x2x128xf32>
    %54 = arith.mulf %51, %53 : vector<1x1x2x128xf32>
    %55 = arith.addf %50, %54 : vector<1x1x2x128xf32>
    %56 = vector.extract_strided_slice %0 {offsets = [0, 2, 0, 0], sizes = [1, 1, 2, 128], strides = [1, 1, 1, 1]} : vector<1x4x2x128xf32> to vector<1x1x2x128xf32>
    %c2_30 = arith.constant 2 : index
    %c2_31 = arith.constant 2 : index
    %57 = memref.load %arg3[%c2_30, %c2_31] : memref<3x4xf32, #tpu.memory_space<smem>>
    %58 = vector.broadcast %57 : f32 to vector<1x1x2x128xf32>
    %59 = arith.mulf %56, %58 : vector<1x1x2x128xf32>
    %60 = arith.addf %55, %59 : vector<1x1x2x128xf32>
    %61 = vector.extract_strided_slice %0 {offsets = [0, 3, 0, 0], sizes = [1, 1, 2, 128], strides = [1, 1, 1, 1]} : vector<1x4x2x128xf32> to vector<1x1x2x128xf32>
    %c2_32 = arith.constant 2 : index
    %c3_33 = arith.constant 3 : index
    %62 = memref.load %arg3[%c2_32, %c3_33] : memref<3x4xf32, #tpu.memory_space<smem>>
    %63 = vector.broadcast %62 : f32 to vector<1x1x2x128xf32>
    %64 = arith.mulf %61, %63 : vector<1x1x2x128xf32>
    %65 = arith.addf %60, %64 : vector<1x1x2x128xf32>
    %c2_34 = arith.constant 2 : index
    %66 = memref.load %arg4[%c2_34] : memref<3xf32, #tpu.memory_space<smem>>
    %67 = vector.broadcast %66 : f32 to vector<1x1x2x128xf32>
    %68 = arith.addf %65, %67 : vector<1x1x2x128xf32>
    %c0_35 = arith.constant 0 : index
    %c2_36 = arith.constant 2 : index
    %c0_37 = arith.constant 0 : index
    %c0_38 = arith.constant 0 : index
    %69 = vector.load %arg5[%c0_35, %c2_36, %c0_37, %c0_38] : memref<1x3x2x128xf32, #tpu.memory_space<vmem>>, vector<1x1x2x128xf32>
    tpu.vector_store %arg5[%c0_35, %c2_36, %c0_37, %c0_38], %68 {strides = array<i32>} : memref<1x3x2x128xf32, #tpu.memory_space<vmem>>, vector<1x1x2x128xf32>,
    return
  }
  func.func @transform_0(%arg0: i32, %arg1: i32) -> (i32, i32, i32, i32) {
    %c0_i32 = arith.constant 0 : i32
    %c0_i32_0 = arith.constant 0 : i32
    %c0_i32_1 = arith.constant 0 : i32
    return %arg0, %c0_i32, %arg1, %c0_i32_0 : i32, i32, i32, i32
  }
  func.func @transform_1(%arg0: i32, %arg1: i32) -> (i32, i32) {
    %c0_i32 = arith.constant 0 : i32
    %c0_i32_0 = arith.constant 0 : i32
    %c0_i32_1 = arith.constant 0 : i32
    return %c0_i32, %c0_i32_0 : i32, i32
  }
  func.func @transform_2(%arg0: i32, %arg1: i32) -> i32 {
    %c0_i32 = arith.constant 0 : i32
    %c0_i32_0 = arith.constant 0 : i32
    return %c0_i32 : i32
  }
  func.func @transform_3(%arg0: i32, %arg1: i32) -> (i32, i32, i32, i32) {
    %c0_i32 = arith.constant 0 : i32
    %c0_i32_0 = arith.constant 0 : i32
    %c0_i32_1 = arith.constant 0 : i32
    return %arg0, %c0_i32, %arg1, %c0_i32_0 : i32, i32, i32, i32
  }
}

</mosaic_0001>

<llo_original>
// kernel: outconv_forward.1
$region0: #{outconv_forward.1}
  #allocation0 [shape = 'u32[]', space=smem, size = 0x4, offset = 0x4, fixed_abs, tag = 'smem constant byte address 0x4 - core index']
  #allocation1 [shape = 'u32[144,128]{1,0:T(1,128)}', space=vmem, size = 0x12000, scoped, tag = 'internal scratch']
  %s0 = inlined_call_operand.vmem [shape: f32[2,4,2,128], index: 0, kind: input, shape index: {}]
  %s1 = inlined_call_operand.vmem [shape: f32[3,4], index: 1, kind: input, shape index: {}]
  %s2 = inlined_call_operand.vmem [shape: f32[3], index: 2, kind: input, shape index: {}]
  %s3 = inlined_call_operand.vmem [shape: f32[2,3,2,128], index: 3, kind: output, shape index: {}]
  %s4 = sld [smem:[#allocation0]]
  $region53: #{outconv_forward.1} parent=0
    _
  %s6 = ssub.s32 1, %s4
  %s7 = scalar_select 0, %s6, %s4
  $region1: #{outconv_forward.1} parent=0
    #allocation2 [shape = 'u8[2048]{0}', space=smem, size = 0x800, scoped, tag = 'input window, operand 1, single buffered']
    #allocation3 [shape = 's32[2]{0}', space=sflag, size = 0x8, scoped, tag = 'scoped memory for outconv_forward.1']
    #allocation4 [shape = 'u8[512]{0}', space=smem, size = 0x200, scoped, tag = 'input window, operand 2, single buffered']
    #allocation5 [shape = 's32[1]{0}', space=sflag, size = 0x4, scoped, tag = 'scoped memory for outconv_forward.1']
    %8 = vsyncpa [#allocation3], 0
    %9 = vsyncpa [#allocation5], 0
    loop: start=0, step=1, limit=4
    $region2: #{outconv_forward.1} parent=1 // loop_pre_header
      _
    $region3: #{outconv_forward.1} parent=1 // loop_header
      %s11 = sphi 0, %s15
      %p12 = scmp.ge.s32.totalorder %s11, 4
      %s18 = sphi 0, %s30
      %s19 = sphi 0, %s26
      %s20 = sphi 0, %s18
      %s21 = sphi 0, %s19
      %s22 = sphi 0, %s20
      %s23 = sphi 0, %s21
      %s35 = sphi 0, %s37
      %s38 = sphi 0, %s35
      %s39 = sphi 0, %s38
      %s55 = sphi 0, %s39
      %s59 = sphi 0, %s59
      %s61 = sphi 0, %s59
      %s62 = sphi 0, %s61
      %s76 = sphi 0, %s62
      %s80 = sphi 0, %s80
      %s82 = sphi 0, %s80
      %s83 = sphi 0, %s82
      %s97 = sphi 0, %s83
      %s105 = sphi 0, %s107
      %s108 = sphi 0, %s105
      %s109 = sphi 0, %s108
      %s125 = sphi 0, %s109
    $region4: #{outconv_forward.1} parent=1 // loop_header_branch
      %14 = sbr.rel (%p12) target = $region8
    $region5: #{outconv_forward.1} parent=1 // loop_body
      %s16 = ssub.s32 %s11, 1
      %s17 = ssub.s32 %s11, 2
      %s24 = sadd.s32 1, %s19
      %p25 = scmp.ge.s32.totalorder %s24, 1
      %s26 = scalar_select %p25, 0, %s24
      %s27 = sadd.s32 1, %s18
      %s28 = scalar_select %p25, %s27, %s18
      %p29 = scmp.ge.s32.totalorder %s28, 2
      %s30 = scalar_select %p29, 0, %s28
      %s31 = ssub.s32 %s18, %s30
      %s32 = ssub.s32 %s19, %s26
      %s33 = sor.u32 %s31, %s32
      %p34 = scmp.eq.s32.totalorder %s33, 0
      %s36 = sadd.s32 %s35, 1
      %s37 = scalar_select %p34, %s35, %s36
      %p40 = pneg %p34
      %p41 = scmp.eq.s32.totalorder %s11, 1
      %p42 = por %p40, %p41
      %p43 = scmp.ne.s32.totalorder %s35, %s38
      %p44 = scmp.eq.s32.totalorder %s11, 0
      %p45 = por %p43, %p44
      %p46 = scmp.ne.s32.totalorder %s35, %s38
      %p47 = scmp.eq.s32.totalorder %s16, 1
      %p48 = por %p46, %p47
      %p49 = scmp.ne.s32.totalorder %s38, %s39
      %p50 = scmp.eq.s32.totalorder %s16, 0
      %p51 = por %p49, %p50
      %p52 = scmp.ne.s32.totalorder %s38, %s39
      %p53 = scmp.eq.s32.totalorder %s17, 1
      %p54 = por %p52, %p53
      %p56 = scmp.ne.s32.totalorder %s39, %s55
      %p57 = scmp.eq.s32.totalorder %s17, 0
      %p58 = por %p56, %p57
      %s60 = sadd.s32 %s59, 1
      %p63 = scmp.eq.s32.totalorder %s11, 1
      %p64 = scmp.ne.s32.totalorder %s59, %s61
      %p65 = scmp.eq.s32.totalorder %s11, 0
      %p66 = por %p64, %p65
      %p67 = scmp.ne.s32.totalorder %s59, %s61
      %p68 = scmp.eq.s32.totalorder %s16, 1
      %p69 = por %p67, %p68
      %p70 = scmp.ne.s32.totalorder %s61, %s62
      %p71 = scmp.eq.s32.totalorder %s16, 0
      %p72 = por %p70, %p71
      %p73 = scmp.ne.s32.totalorder %s61, %s62
      %p74 = scmp.eq.s32.totalorder %s17, 1
      %p75 = por %p73, %p74
      %p77 = scmp.ne.s32.totalorder %s62, %s76
      %p78 = scmp.eq.s32.totalorder %s17, 0
      %p79 = por %p77, %p78
      %s81 = sadd.s32 %s80, 1
      %p84 = scmp.eq.s32.totalorder %s11, 1
      %p85 = scmp.ne.s32.totalorder %s80, %s82
      %p86 = scmp.eq.s32.totalorder %s11, 0
      %p87 = por %p85, %p86
      %p88 = scmp.ne.s32.totalorder %s80, %s82
      %p89 = scmp.eq.s32.totalorder %s16, 1
      %p90 = por %p88, %p89
      %p91 = scmp.ne.s32.totalorder %s82, %s83
      %p92 = scmp.eq.s32.totalorder %s16, 0
      %p93 = por %p91, %p92
      %p94 = scmp.ne.s32.totalorder %s82, %s83
      %p95 = scmp.eq.s32.totalorder %s17, 1
      %p96 = por %p94, %p95
      %p98 = scmp.ne.s32.totalorder %s83, %s97
      %p99 = scmp.eq.s32.totalorder %s17, 0
      %p100 = por %p98, %p99
      %s101 = ssub.s32 %s18, %s30
      %s102 = ssub.s32 %s19, %s26
      %s103 = sor.u32 %s101, %s102
      %p104 = scmp.eq.s32.totalorder %s103, 0
      %s106 = sadd.s32 %s105, 1
      %s107 = scalar_select %p104, %s105, %s106
      %p110 = pneg %p104
      %p111 = scmp.eq.s32.totalorder %s11, 1
      %p112 = por %p110, %p111
      %p113 = scmp.ne.s32.totalorder %s105, %s108
      %p114 = scmp.eq.s32.totalorder %s11, 0
      %p115 = por %p113, %p114
      %p116 = scmp.ne.s32.totalorder %s105, %s108
      %p117 = scmp.eq.s32.totalorder %s16, 1
      %p118 = por %p116, %p117
      %p119 = scmp.ne.s32.totalorder %s108, %s109
      %p120 = scmp.eq.s32.totalorder %s16, 0
      %p121 = por %p119, %p120
      %p122 = scmp.ne.s32.totalorder %s108, %s109
      %p123 = scmp.eq.s32.totalorder %s17, 1
      %p124 = por %p122, %p123
      %p126 = scmp.ne.s32.totalorder %s109, %s125
      %p127 = scmp.eq.s32.totalorder %s17, 0
      %p128 = por %p126, %p127
      %p129 = scmp.le.s32.totalorder 1, %s11
      %p130 = scmp.lt.s32.totalorder %s11, 3
      %p131 = pnand %p129, %p130
      %p132 = pneg %p131
      // Predicated region
      $region9: #{outconv_forward.1} parent=5 // pred_check
        _
      $region10: #{outconv_forward.1} parent=5 // pred_check_branch
        %134 = sbr.rel (%p131) target = $region12
      $region11: #{outconv_forward.1} parent=5 // pred_region
        %s135 = ssub.s32 %s11, 1
        // Predicated region
        $region13: #{outconv_forward.1} parent=11 // pred_check
          %p136 = pneg %p72
        $region14: #{outconv_forward.1} parent=11 // pred_check_branch
          %138 = sbr.rel (%p136) target = $region16
        $region15: #{outconv_forward.1} parent=11 // pred_region
          %s140 = ssub.s32 64, 64
          %141 = vsyncadd [#allocation3], %s140
          %s143 = sshll.u32 %s1, 4
          %s144 = int_to_ptr.vmem [resolvable:$true] %s143
          %146 = dma.vmem_to_smem %s144, 64, [#allocation2], [#allocation3]
        $region16: #{outconv_forward.1} parent=11 // pred_fallthru
          _
        // Predicated region
        $region17: #{outconv_forward.1} parent=11 // pred_check
          %p147 = pneg %p93
        $region18: #{outconv_forward.1} parent=11 // pred_check_branch
          %149 = sbr.rel (%p147) target = $region20
        $region19: #{outconv_forward.1} parent=11 // pred_region
          %s151 = ssub.s32 16, 16
          %152 = vsyncadd [#allocation5], %s151
          %s154 = sshll.u32 %s2, 4
          %s155 = int_to_ptr.vmem [resolvable:$true] %s154
          %157 = dma.vmem_to_smem %s155, 16, [#allocation4], [#allocation5]
        $region20: #{outconv_forward.1} parent=11 // pred_fallthru
          _
      $region12: #{outconv_forward.1} parent=5 // pred_fallthru
        _
      %p158 = scmp.lt.s32.totalorder %s11, 2
      // Predicated region
      $region21: #{outconv_forward.1} parent=5 // pred_check
        %p159 = pneg %p158
      $region22: #{outconv_forward.1} parent=5 // pred_check_branch
        %161 = sbr.rel (%p159) target = $region24
      $region23: #{outconv_forward.1} parent=5 // pred_region
        // Predicated region
        $region25: #{outconv_forward.1} parent=23 // pred_check
          %p162 = pneg %p45
        $region26: #{outconv_forward.1} parent=23 // pred_check_branch
          %164 = sbr.rel (%p162) target = $region28
        $region27: #{outconv_forward.1} parent=23 // pred_region
          %p165 = scmp.lt.s32.totalorder %s18, 1
          %s166 = scalar_select %p165, %s18, 1
          %p167 = scmp.lt.s32.totalorder %s19, 0
          %s168 = scalar_select %p167, %s19, 0
          %s169 = smul.addr %s166, 4
          %s170 = sadd.s32 %s168, %s169
          %s171 = smul.addr %s170, 2
          %s172 = scalar_lea.vmem %s0, %s171
        $region28: #{outconv_forward.1} parent=23 // pred_fallthru
          _
      $region24: #{outconv_forward.1} parent=5 // pred_fallthru
        _
      %p173 = scmp.le.s32.totalorder 1, %s11
      %p174 = scmp.lt.s32.totalorder %s11, 3
      %p175 = pnand %p173, %p174
      %p176 = pneg %p175
      // Predicated region
      $region29: #{outconv_forward.1} parent=5 // pred_check
        _
      $region30: #{outconv_forward.1} parent=5 // pred_check_branch
        %178 = sbr.rel (%p175) target = $region32
      $region31: #{outconv_forward.1} parent=5 // pred_region
        %s179 = ssub.s32 %s11, 1
        // Predicated region
        $region33: #{outconv_forward.1} parent=31 // pred_check
          %p180 = pneg %p72
        $region34: #{outconv_forward.1} parent=31 // pred_check_branch
          %182 = sbr.rel (%p180) target = $region36
        $region35: #{outconv_forward.1} parent=31 // pred_region
          %183 = dma.done [#allocation3], 64
        $region36: #{outconv_forward.1} parent=31 // pred_fallthru
          _
        // Predicated region
        $region37: #{outconv_forward.1} parent=31 // pred_check
          %p184 = pneg %p93
        $region38: #{outconv_forward.1} parent=31 // pred_check_branch
          %186 = sbr.rel (%p184) target = $region40
        $region39: #{outconv_forward.1} parent=31 // pred_region
          %187 = dma.done [#allocation5], 16
        $region40: #{outconv_forward.1} parent=31 // pred_fallthru
          _
        %188 = sfence
        %p189 = scmp.lt.s32.totalorder %s20, 1
        %s190 = scalar_select %p189, %s20, 1
        %p191 = scmp.lt.s32.totalorder %s21, 0
        %s192 = scalar_select %p191, %s21, 0
        %s193 = smul.addr %s190, 4
        %s194 = sadd.s32 %s192, %s193
        %s195 = smul.addr %s194, 2
        %s196 = scalar_lea.vmem %s0, %s195
        %p197 = pneg %p51
        %p198 = pneg %p48
        %p199 = pneg %p72
        %p200 = pneg %p69
        %p201 = pneg %p93
        %p202 = pneg %p90
        %p203 = pneg %p121
        %p204 = pneg %p118
        %p205 = scmp.lt.s32.totalorder %s20, 1
        %s206 = scalar_select %p205, %s20, 1
        %p207 = scmp.lt.s32.totalorder %s21, 0
        %s208 = scalar_select %p207, %s21, 0
        %s209 = smul.addr %s206, 3
        %s210 = sadd.s32 %s208, %s209
        %s211 = smul.addr %s210, 2
        %s212 = scalar_lea.vmem %s3, %s211
        %p213 = scmp.lt.s32.totalorder %s20, 1
        %s214 = scalar_select %p213, %s20, 1
        %p215 = scmp.lt.s32.totalorder %s21, 0
        %s216 = scalar_select %p215, %s21, 0
        %s217 = smul.addr %s214, 4
        %s218 = sadd.s32 %s216, %s217
        %s219 = smul.addr %s218, 2
        %s220 = scalar_lea.vmem %s0, %s219
        %p221 = scmp.lt.s32.totalorder %s20, 1
        %s222 = scalar_select %p221, %s20, 1
        %p223 = scmp.lt.s32.totalorder %s21, 0
        %s224 = scalar_select %p223, %s21, 0
        %s225 = smul.addr %s222, 3
        %s226 = sadd.s32 %s224, %s225
        %s227 = smul.addr %s226, 2
        %s228 = scalar_lea.vmem %s3, %s227
        %v229 = vld [vmem:[%s220] sm:$0x3]
        %v230 = vld [vmem:[%s220 + $0x2] sm:$0x3]
        %v231 = vld [vmem:[%s220 + $0x4] sm:$0x3]
        %v232 = vld [vmem:[%s220 + $0x6] sm:$0x3]
        %s233 = sld [smem:[#allocation2]]
        %v234 = vstv %s233
        %v235 = vmul.f32 %v229, %v234
        %s236 = sld [smem:[#allocation2 + $0x1]]
        %v237 = vstv %s236
        %v238 = vmul.f32 %v230, %v237
        %v239 = vadd.f32 %v235, %v238
        %s240 = sld [smem:[#allocation2 + $0x2]]
        %v241 = vstv %s240
        %v242 = vmul.f32 %v231, %v241
        %v243 = vadd.f32 %v239, %v242
        %s244 = sld [smem:[#allocation2 + $0x3]]
        %v245 = vstv %s244
        %v246 = vmul.f32 %v232, %v245
        %v247 = vadd.f32 %v243, %v246
        %s248 = sld [smem:[#allocation4]]
        %v249 = vstv %s248
        %v250 = vadd.f32 %v247, %v249
        %251 = vst [vmem:[%s228] sm:$0x3] %v250
        %s252 = sld [smem:[#allocation2 + $0x80]]
        %v253 = vstv %s252
        %v254 = vmul.f32 %v229, %v253
        %s255 = sld [smem:[#allocation2 + $0x81]]
        %v256 = vstv %s255
        %v257 = vmul.f32 %v230, %v256
        %v258 = vadd.f32 %v254, %v257
        %s259 = sld [smem:[#allocation2 + $0x82]]
        %v260 = vstv %s259
        %v261 = vmul.f32 %v231, %v260
        %v262 = vadd.f32 %v258, %v261
        %s263 = sld [smem:[#allocation2 + $0x83]]
        %v264 = vstv %s263
        %v265 = vmul.f32 %v232, %v264
        %v266 = vadd.f32 %v262, %v265
        %s267 = sld [smem:[#allocation4 + $0x1]]
        %v268 = vstv %s267
        %v269 = vadd.f32 %v266, %v268
        %s270 = scalar_lea.vmem %s228, 2
        %271 = vst [vmem:[%s270] sm:$0x3] %v269
        %s272 = sld [smem:[#allocation2 + $0x100]]
        %v273 = vstv %s272
        %v274 = vmul.f32 %v229, %v273
        %s275 = sld [smem:[#allocation2 + $0x101]]
        %v276 = vstv %s275
        %v277 = vmul.f32 %v230, %v276
        %v278 = vadd.f32 %v274, %v277
        %s279 = sld [smem:[#allocation2 + $0x102]]
        %v280 = vstv %s279
        %v281 = vmul.f32 %v231, %v280
        %v282 = vadd.f32 %v278, %v281
        %s283 = sld [smem:[#allocation2 + $0x103]]
        %v284 = vstv %s283
        %v285 = vmul.f32 %v232, %v284
        %v286 = vadd.f32 %v282, %v285
        %s287 = sld [smem:[#allocation4 + $0x2]]
        %v288 = vstv %s287
        %v289 = vadd.f32 %v286, %v288
        %s290 = scalar_lea.vmem %s228, 4
        %291 = vst [vmem:[%s290] sm:$0x3] %v289
        %p292 = scmp.lt.s32.totalorder %s20, 1
        %s293 = scalar_select %p292, %s20, 1
        %p294 = scmp.lt.s32.totalorder %s21, 0
        %s295 = scalar_select %p294, %s21, 0
        %s296 = smul.addr %s293, 3
        %s297 = sadd.s32 %s295, %s296
        %s298 = smul.addr %s297, 2
        %s299 = scalar_lea.vmem %s3, %s298
        // Predicated region
        $region41: #{outconv_forward.1} parent=31 // pred_check
          %p300 = pneg %p118
        $region42: #{outconv_forward.1} parent=31 // pred_check_branch
          %302 = sbr.rel (%p300) target = $region44
        $region43: #{outconv_forward.1} parent=31 // pred_region
          _
        $region44: #{outconv_forward.1} parent=31 // pred_fallthru
          _
      $region32: #{outconv_forward.1} parent=5 // pred_fallthru
        _
      %p303 = scmp.le.s32.totalorder 2, %s11
      // Predicated region
      $region45: #{outconv_forward.1} parent=5 // pred_check
        %p304 = pneg %p303
      $region46: #{outconv_forward.1} parent=5 // pred_check_branch
        %306 = sbr.rel (%p304) target = $region48
      $region47: #{outconv_forward.1} parent=5 // pred_region
        %s307 = ssub.s32 %s11, 2
        // Predicated region
        $region49: #{outconv_forward.1} parent=47 // pred_check
          %p308 = pneg %p124
        $region50: #{outconv_forward.1} parent=47 // pred_check_branch
          %310 = sbr.rel (%p308) target = $region52
        $region51: #{outconv_forward.1} parent=47 // pred_region
          %p311 = scmp.lt.s32.totalorder %s22, 1
          %s312 = scalar_select %p311, %s22, 1
          %p313 = scmp.lt.s32.totalorder %s23, 0
          %s314 = scalar_select %p313, %s23, 0
          %s315 = smul.addr %s312, 3
          %s316 = sadd.s32 %s314, %s315
          %s317 = smul.addr %s316, 2
          %s318 = scalar_lea.vmem %s3, %s317
        $region52: #{outconv_forward.1} parent=47 // pred_fallthru
          _
      $region48: #{outconv_forward.1} parent=5 // pred_fallthru
        _
    $region6: #{outconv_forward.1} parent=1 // loop_footer
      %s15 = sadd.s32 1, %s11
    $region7: #{outconv_forward.1} parent=1 // loop_footer_branch
      %10 = sbr.rel target = $region3
    $region8: #{outconv_forward.1} parent=1 // loop_exit
      _
    %319 = vsyncpa [#allocation3], 1
    %s320 = scalar_lea.sflag [#allocation3], 1
    %321 = vsyncpa %s320, 1
    %322 = vsyncpa [#allocation5], 1

</llo_original>
